<compile_context>
chip_gen: v7x
topology: tpu7x:2x2x1
jax: 0.10.0
libtpu: 0.0.40
codegen_flags: <defaults>
</compile_context>

<pallas_src>
import jax
import jax.numpy as jnp
from jax.experimental import pallas as pl
from jax.experimental.pallas import tpu as pltpu


def _round_up(x, m):
    return (x + m - 1) // m * m


def _res_classifier_kernel(x_ref, w1_ref, scale_ref, shift_ref, w2_ref, b2_ref, o_ref):
    # In-kernel cast of x to the MXU compute dtype (VPU op, hidden under MXU/DMA).
    x = x_ref[...].astype(w1_ref.dtype)
    # Hidden layer: x @ w1 (f32 accumulation), then eval-mode BN (f32) + ReLU.
    h = jnp.dot(x, w1_ref[...], preferred_element_type=jnp.float32)
    h = jnp.maximum(h * scale_ref[...] + shift_ref[...], 0.0)
    # Output layer: h @ w2' + b2'   [1/temperature pre-folded into w2', b2']
    y = jnp.dot(h.astype(w2_ref.dtype), w2_ref[...],
                preferred_element_type=jnp.float32)
    o_ref[...] = (y + b2_ref[...]).astype(o_ref.dtype)


def res_classifier_forward(x, params, *, temperature=1.0, tile_n=None,
                           compute_dtype=jnp.bfloat16):
    """Eval-mode forward of ResClassifier.

    x: (N, C0)
    params: dict with
      w1      : (C0, C1)   -- first Linear weight, pre-transposed (in, out)
      gamma   : (C1,)      -- BatchNorm1d weight
      beta    : (C1,)      -- BatchNorm1d bias
      run_mean: (C1,)      -- BatchNorm1d running_mean
      run_var : (C1,)      -- BatchNorm1d running_var
      w2      : (C1, C2)   -- last Linear weight, pre-transposed (in, out)
      b2      : (C2,)      -- last Linear bias
    """
    N, C0 = x.shape
    C1 = params["w1"].shape[1]
    C2 = params["w2"].shape[1]
    eps = 1e-5
    inv_t = jnp.float32(1.0 / temperature)

    # Eval-mode BatchNorm1d -> per-feature f32 scale/shift, applied inside the
    # kernel on the f32-accumulated hidden activations (avoids folding a possibly
    # large scale into bf16 w1).
    gamma = params["gamma"].astype(jnp.float32)
    inv_std = jax.lax.rsqrt(params["run_var"].astype(jnp.float32) + eps)
    scale = (gamma * inv_std).reshape(1, C1)
    shift = (params["beta"].astype(jnp.float32)
             - gamma * params["run_mean"].astype(jnp.float32) * inv_std
             ).reshape(1, C1)

    # Lane-dense output: zero-pad C2 up to a multiple of 128 (weights/bias only;
    # tiny host-side one-time cost, extra columns sliced off after the call).
    C2p = max(128, _round_up(C2, 128))
    w1 = params["w1"].astype(compute_dtype)
    w2 = (params["w2"].astype(jnp.float32) * inv_t).astype(compute_dtype)
    if C2p != C2:
        w2 = jnp.pad(w2, ((0, 0), (0, C2p - C2)))
    b2 = jnp.pad(params["b2"].astype(jnp.float32) * inv_t,
                 (0, C2p - C2)).reshape(1, C2p)

    in_itemsize = jnp.dtype(x.dtype).itemsize
    comp_itemsize = jnp.dtype(compute_dtype).itemsize

    # Generation-aware VMEM budget / tile sizing.
    vmem_cap = 128 << 20
    try:
        vmem_cap = int(pltpu.get_tpu_info().vmem_capacity_bytes)
    except Exception:
        pass
    if vmem_cap <= (64 << 20):
        # v7x-class: 64 MiB VMEM per TC, 2 TensorCores split the parallel batch axis.
        vmem_limit_cap = 56 << 20
        max_tile = 2048
        min_grid_steps = 2
    else:
        # v5e / v6e: 128 MiB VMEM, single TensorCore. 2048 amortizes per-step
        # overhead on v6e while staying inside v5e's spill-safe range.
        vmem_limit_cap = 100 << 20
        max_tile = 2048
        min_grid_steps = 1

    def _vmem_need(t):
        # Conservative estimate: double-buffered x/out streams (x in its HBM dtype),
        # in-kernel cast temp, f32 + cast hidden activations, 2x resident weights.
        return (2 * t * C0 * in_itemsize
                + t * C0 * comp_itemsize
                + 2 * t * C2p * 4
                + t * C1 * (4 + comp_itemsize)
                + 2 * (C0 * C1 + C1 * C2p) * comp_itemsize
                + 2 * (2 * C1 + C2p) * 4)

    if tile_n is None:
        tile_n = max_tile
        while tile_n > 8 and _vmem_need(tile_n) > vmem_limit_cap - (6 << 20):
            tile_n //= 2
        if min_grid_steps > 1:
            # Keep >= min_grid_steps grid steps so both v7x TensorCores get work.
            tile_n = min(tile_n, max(8, _round_up(pl.cdiv(N, min_grid_steps), 8)))
    tile_n = max(8, min(_round_up(tile_n, 8), _round_up(N, 8)))

    grid = (pl.cdiv(N, tile_n),)   # ragged last block; no host-side padding of x

    cost = pl.CostEstimate(
        flops=2 * N * (C0 * C1 + C1 * C2p),
        transcendentals=0,
        bytes_accessed=(N * C0 * in_itemsize                   # x stream (read once)
                        + (C0 * C1 + C1 * C2p) * comp_itemsize  # weights
                        + (2 * C1 + C2p) * 4                    # scale / shift / bias
                        + N * C2p * 4))                         # output

    vmem_limit = int(min(max(_vmem_need(tile_n) + (8 << 20), 32 << 20),
                         vmem_limit_cap))

    out = pl.pallas_call(
        _res_classifier_kernel,
        out_shape=jax.ShapeDtypeStruct((N, C2p), jnp.float32),
        grid=grid,
        in_specs=[
            pl.BlockSpec((tile_n, C0), lambda i: (i, 0)),   # x: streamed over N
            pl.BlockSpec((C0, C1), lambda i: (0, 0)),       # w1: VMEM-resident
            pl.BlockSpec((1, C1), lambda i: (0, 0)),        # BN scale (f32)
            pl.BlockSpec((1, C1), lambda i: (0, 0)),        # BN shift (f32)
            pl.BlockSpec((C1, C2p), lambda i: (0, 0)),      # w2': VMEM-resident, lane-padded
            pl.BlockSpec((1, C2p), lambda i: (0, 0)),       # bias'
        ],
        out_specs=pl.BlockSpec((tile_n, C2p), lambda i: (i, 0)),
        compiler_params=pltpu.CompilerParams(
            dimension_semantics=("parallel",),
            vmem_limit_bytes=vmem_limit),
        cost_estimate=cost,
    )(x, w1, scale, shift, w2, b2)

    return out[:, :C2] if C2p != C2 else out


def init_params(key, channels=(32, 16, 12)):
    """Deterministic synthetic parameters matching the module's shapes."""
    c0, c1, c2 = channels
    k1, k2, k3, k4, k5 = jax.random.split(key, 5)
    # PyTorch Linear weight is (out, in); store pre-transposed as (in, out).
    bound1 = 1.0 / jnp.sqrt(c0)
    bound2 = 1.0 / jnp.sqrt(c1)
    return {
        "w1": jax.random.uniform(k1, (c0, c1), jnp.float32, -bound1, bound1),
        "gamma": jnp.ones((c1,), jnp.float32),
        "beta": jnp.zeros((c1,), jnp.float32),
        "run_mean": 0.1 * jax.random.normal(k3, (c1,), jnp.float32),
        "run_var": jnp.abs(jax.random.normal(k4, (c1,), jnp.float32)) + 0.5,
        "w2": jax.random.uniform(k2, (c1, c2), jnp.float32, -bound2, bound2),
        "b2": jax.random.uniform(k5, (c2,), jnp.float32, -bound2, bound2),
    }


def _reference_forward(x, params, temperature=1.0):
    eps = 1e-5
    h = x @ params["w1"]
    h = (h - params["run_mean"]) / jnp.sqrt(params["run_var"] + eps)
    h = h * params["gamma"] + params["beta"]
    h = jnp.maximum(h, 0.0)
    y = h @ params["w2"] + params["b2"]
    return y / temperature


if __name__ == "__main__":
    key = jax.random.PRNGKey(0)
    kx, kp = jax.random.split(key)

    N = 24                     # not a multiple of tile_n -> exercises the ragged last block
    channels = (32, 16, 12)    # small stand-in for (2048, 256, 12)
    temperature = 2.0

    x = jax.random.normal(kx, (N, channels[0]), jnp.float32)
    params = init_params(kp, channels)
    ref = _reference_forward(x, params, temperature=temperature)

    # f32-operand run with an explicit small tile: exact-ish check of the fused semantics.
    out_f32 = res_classifier_forward(x, params, temperature=temperature,
                                     tile_n=16, compute_dtype=jnp.float32)
    out_f32 = jax.block_until_ready(out_f32)
    assert out_f32.shape == (N, channels[-1])
    assert jnp.allclose(out_f32, ref, atol=1e-4, rtol=1e-4), "f32 mismatch vs reference"

    # Default bf16-operand run with auto (generation-aware) tile selection.
    out_bf16 = res_classifier_forward(x, params, temperature=temperature)
    out_bf16 = jax.block_until_ready(out_bf16)
    assert out_bf16.shape == (N, channels[-1])
    assert jnp.allclose(out_bf16, ref, atol=5e-2, rtol=5e-2), "bf16 mismatch vs reference"

    print("KERNEL_OK")
</pallas_src>

<mosaic_0001>
module attributes {stable_mosaic.version = 11 : i64} {
  func.func @_res_classifier_kernel(%arg0: i32, %arg1: memref<16x32xf32, #tpu.memory_space<vmem>>, %arg2: memref<32x16xf32, #tpu.memory_space<vmem>>, %arg3: memref<1x16xf32, #tpu.memory_space<vmem>>, %arg4: memref<1x16xf32, #tpu.memory_space<vmem>>, %arg5: memref<16x128xf32, #tpu.memory_space<vmem>>, %arg6: memref<1x128xf32, #tpu.memory_space<vmem>>, %arg7: memref<16x128xf32, #tpu.memory_space<vmem>>) attributes {dimension_semantics = [#tpu.dimension_semantics<parallel>], iteration_bounds = array<i64: 2>, scalar_prefetch = 0 : i64, scratch_operands = 0 : i64, tpu.core_type = #tpu.core_type<tc>, window_params = [{transform_indices = @transform_0, window_bounds = array<i64: 16, 32>}, {pipeline_mode = #tpu.pipeline_mode<synchronous>, transform_indices = @transform_1, window_bounds = array<i64: 32, 16>}, {pipeline_mode = #tpu.pipeline_mode<synchronous>, transform_indices = @transform_2, window_bounds = array<i64: 1, 16>}, {pipeline_mode = #tpu.pipeline_mode<synchronous>, transform_indices = @transform_3, window_bounds = array<i64: 1, 16>}, {pipeline_mode = #tpu.pipeline_mode<synchronous>, transform_indices = @transform_4, window_bounds = array<i64: 16, 128>}, {pipeline_mode = #tpu.pipeline_mode<synchronous>, transform_indices = @transform_5, window_bounds = array<i64: 1, 128>}, {transform_indices = @transform_6, window_bounds = array<i64: 16, 128>}]} {
    %c0 = arith.constant 0 : index
    %c0_0 = arith.constant 0 : index
    %0 = vector.load %arg1[%c0, %c0_0] : memref<16x32xf32, #tpu.memory_space<vmem>>, vector<16x32xf32>
    %c0_1 = arith.constant 0 : index
    %c0_2 = arith.constant 0 : index
    %1 = vector.load %arg2[%c0_1, %c0_2] : memref<32x16xf32, #tpu.memory_space<vmem>>, vector<32x16xf32>
    %cst = arith.constant dense<0.000000e+00> : vector<16x16xf32>
    %2 = tpu.matmul %0, %1, %cst {dimension_numbers = #tpu.dot_dimension_numbers<[1], [0], [0], [1], [0, 0, 1, 1], [], []>} : vector<16x32xf32>, vector<32x16xf32>, vector<16x16xf32> -> vector<16x16xf32>
    %c0_3 = arith.constant 0 : index
    %c0_4 = arith.constant 0 : index
    %3 = vector.load %arg3[%c0_3, %c0_4] : memref<1x16xf32, #tpu.memory_space<vmem>>, vector<1x16xf32>
    %4 = vector.broadcast %3 : vector<1x16xf32> to vector<16x16xf32>
    %5 = arith.mulf %2, %4 : vector<16x16xf32>
    %c0_5 = arith.constant 0 : index
    %c0_6 = arith.constant 0 : index
    %6 = vector.load %arg4[%c0_5, %c0_6] : memref<1x16xf32, #tpu.memory_space<vmem>>, vector<1x16xf32>
    %7 = vector.broadcast %6 : vector<1x16xf32> to vector<16x16xf32>
    %8 = arith.addf %5, %7 : vector<16x16xf32>
    %cst_7 = arith.constant 0.000000e+00 : f32
    %9 = vector.broadcast %cst_7 : f32 to vector<16x16xf32>
    %10 = arith.maximumf %8, %9 : vector<16x16xf32>
    %c0_8 = arith.constant 0 : index
    %c0_9 = arith.constant 0 : index
    %11 = vector.load %arg5[%c0_8, %c0_9] : memref<16x128xf32, #tpu.memory_space<vmem>>, vector<16x128xf32>
    %cst_10 = arith.constant dense<0.000000e+00> : vector<16x128xf32>
    %12 = tpu.matmul %10, %11, %cst_10 {dimension_numbers = #tpu.dot_dimension_numbers<[1], [0], [0], [1], [0, 0, 1, 1], [], []>} : vector<16x16xf32>, vector<16x128xf32>, vector<16x128xf32> -> vector<16x128xf32>
    %c0_11 = arith.constant 0 : index
    %c0_12 = arith.constant 0 : index
    %13 = vector.load %arg6[%c0_11, %c0_12] : memref<1x128xf32, #tpu.memory_space<vmem>>, vector<1x128xf32>
    %14 = vector.broadcast %13 : vector<1x128xf32> to vector<16x128xf32>
    %15 = arith.addf %12, %14 : vector<16x128xf32>
    %c0_13 = arith.constant 0 : index
    %c0_14 = arith.constant 0 : index
    %16 = vector.load %arg7[%c0_13, %c0_14] : memref<16x128xf32, #tpu.memory_space<vmem>>, vector<16x128xf32>
    tpu.vector_store %arg7[%c0_13, %c0_14], %15 {strides = array<i32>} : memref<16x128xf32, #tpu.memory_space<vmem>>, vector<16x128xf32>,
    return
  }
  func.func @transform_0(%arg0: i32) -> (i32, i32) {
    %c0_i32 = arith.constant 0 : i32
    %c0_i32_0 = arith.constant 0 : i32
    return %arg0, %c0_i32 : i32, i32
  }
  func.func @transform_1(%arg0: i32) -> (i32, i32) {
    %c0_i32 = arith.constant 0 : i32
    %c0_i32_0 = arith.constant 0 : i32
    %c0_i32_1 = arith.constant 0 : i32
    return %c0_i32, %c0_i32_0 : i32, i32
  }
  func.func @transform_2(%arg0: i32) -> (i32, i32) {
    %c0_i32 = arith.constant 0 : i32
    %c0_i32_0 = arith.constant 0 : i32
    %c0_i32_1 = arith.constant 0 : i32
    return %c0_i32, %c0_i32_0 : i32, i32
  }
  func.func @transform_3(%arg0: i32) -> (i32, i32) {
    %c0_i32 = arith.constant 0 : i32
    %c0_i32_0 = arith.constant 0 : i32
    %c0_i32_1 = arith.constant 0 : i32
    return %c0_i32, %c0_i32_0 : i32, i32
  }
  func.func @transform_4(%arg0: i32) -> (i32, i32) {
    %c0_i32 = arith.constant 0 : i32
    %c0_i32_0 = arith.constant 0 : i32
    %c0_i32_1 = arith.constant 0 : i32
    return %c0_i32, %c0_i32_0 : i32, i32
  }
  func.func @transform_5(%arg0: i32) -> (i32, i32) {
    %c0_i32 = arith.constant 0 : i32
    %c0_i32_0 = arith.constant 0 : i32
    %c0_i32_1 = arith.constant 0 : i32
    return %c0_i32, %c0_i32_0 : i32, i32
  }
  func.func @transform_6(%arg0: i32) -> (i32, i32) {
    %c0_i32 = arith.constant 0 : i32
    %c0_i32_0 = arith.constant 0 : i32
    return %arg0, %c0_i32 : i32, i32
  }
}

</mosaic_0001>

<llo_original>
// kernel: tpu_custom_call.1
$region0: #{tpu_custom_call.1}
  #allocation0 [shape = 'u32[]', space=smem, size = 0x4, offset = 0x4, fixed_abs, tag = 'smem constant byte address 0x4 - core index']
  #allocation1 [shape = 'u32[144,128]{1,0:T(1,128)}', space=vmem, size = 0x12000, scoped, tag = 'internal scratch']
  %s0 = inlined_call_operand.vmem [shape: f32[24,32], index: 0, kind: input, shape index: {}]
  %s1 = inlined_call_operand.vmem [shape: f32[32,16], index: 1, kind: input, shape index: {}]
  %s2 = inlined_call_operand.vmem [shape: f32[1,16], index: 2, kind: input, shape index: {}]
  %s3 = inlined_call_operand.vmem [shape: f32[1,16], index: 3, kind: input, shape index: {}]
  %s4 = inlined_call_operand.vmem [shape: f32[16,128], index: 4, kind: input, shape index: {}]
  %s5 = inlined_call_operand.vmem [shape: f32[1,128], index: 5, kind: input, shape index: {}]
  %s6 = inlined_call_operand.hbm [shape: f32[24,128], index: 6, kind: output, shape index: {}]
  %s7 = sld [smem:[#allocation0]]
  $region57: #{tpu_custom_call.1} parent=0
    _
  %s9 = ssub.s32 1, %s7
  %s10 = scalar_select 0, %s9, %s7
  $region1: #{tpu_custom_call.1} parent=0
    #allocation2 [shape = 'u8[16384]{0}', space=vmem, size = 0x4000, scoped, tag = 'output window, operand 0']
    #allocation3 [shape = 's32[2]{0}', space=sflag, size = 0x8, scoped, tag = 'scoped memory for tpu_custom_call.1']
    %11 = vsyncpa [#allocation3], 0
    %s12 = scalar_lea.sflag [#allocation3], 1
    %13 = vsyncpa %s12, 0
    loop: start=0, step=1, limit=4
    $region2: #{tpu_custom_call.1} parent=1 // loop_pre_header
      _
    $region3: #{tpu_custom_call.1} parent=1 // loop_header
      %s15 = sphi 0, %s19
      %p16 = scmp.ge.s32.totalorder %s15, 4
      %s25 = sphi 0, %s27
      %s28 = sphi 0, %s25
      %s29 = sphi 0, %s28
      %s45 = sphi 0, %s29
      %s49 = sphi 0, %s49
      %s51 = sphi 0, %s49
      %s52 = sphi 0, %s51
      %s66 = sphi 0, %s52
      %s70 = sphi 0, %s70
      %s72 = sphi 0, %s70
      %s73 = sphi 0, %s72
      %s87 = sphi 0, %s73
      %s91 = sphi 0, %s91
      %s93 = sphi 0, %s91
      %s94 = sphi 0, %s93
      %s108 = sphi 0, %s94
      %s112 = sphi 0, %s112
      %s114 = sphi 0, %s112
      %s115 = sphi 0, %s114
      %s129 = sphi 0, %s115
      %s133 = sphi 0, %s133
      %s135 = sphi 0, %s133
      %s136 = sphi 0, %s135
      %s150 = sphi 0, %s136
      %s156 = sphi 0, %s158
      %s159 = sphi 0, %s156
      %s160 = sphi 0, %s159
      %s176 = sphi 0, %s160
    $region4: #{tpu_custom_call.1} parent=1 // loop_header_branch
      %18 = sbr.rel (%p16) target = $region8
    $region5: #{tpu_custom_call.1} parent=1 // loop_body
      %s20 = ssub.s32 %s15, 1
      %s21 = ssub.s32 %s15, 2
      %s22 = sadd.s32 %s15, 1
      %s23 = ssub.s32 %s15, %s22
      %p24 = scmp.eq.s32.totalorder %s23, 0
      %s26 = sadd.s32 %s25, 1
      %s27 = scalar_select %p24, %s25, %s26
      %p30 = pneg %p24
      %p31 = scmp.eq.s32.totalorder %s15, 1
      %p32 = por %p30, %p31
      %p33 = scmp.ne.s32.totalorder %s25, %s28
      %p34 = scmp.eq.s32.totalorder %s15, 0
      %p35 = por %p33, %p34
      %p36 = scmp.ne.s32.totalorder %s25, %s28
      %p37 = scmp.eq.s32.totalorder %s20, 1
      %p38 = por %p36, %p37
      %p39 = scmp.ne.s32.totalorder %s28, %s29
      %p40 = scmp.eq.s32.totalorder %s20, 0
      %p41 = por %p39, %p40
      %p42 = scmp.ne.s32.totalorder %s28, %s29
      %p43 = scmp.eq.s32.totalorder %s21, 1
      %p44 = por %p42, %p43
      %p46 = scmp.ne.s32.totalorder %s29, %s45
      %p47 = scmp.eq.s32.totalorder %s21, 0
      %p48 = por %p46, %p47
      %s50 = sadd.s32 %s49, 1
      %p53 = scmp.eq.s32.totalorder %s15, 1
      %p54 = scmp.ne.s32.totalorder %s49, %s51
      %p55 = scmp.eq.s32.totalorder %s15, 0
      %p56 = por %p54, %p55
      %p57 = scmp.ne.s32.totalorder %s49, %s51
      %p58 = scmp.eq.s32.totalorder %s20, 1
      %p59 = por %p57, %p58
      %p60 = scmp.ne.s32.totalorder %s51, %s52
      %p61 = scmp.eq.s32.totalorder %s20, 0
      %p62 = por %p60, %p61
      %p63 = scmp.ne.s32.totalorder %s51, %s52
      %p64 = scmp.eq.s32.totalorder %s21, 1
      %p65 = por %p63, %p64
      %p67 = scmp.ne.s32.totalorder %s52, %s66
      %p68 = scmp.eq.s32.totalorder %s21, 0
      %p69 = por %p67, %p68
      %s71 = sadd.s32 %s70, 1
      %p74 = scmp.eq.s32.totalorder %s15, 1
      %p75 = scmp.ne.s32.totalorder %s70, %s72
      %p76 = scmp.eq.s32.totalorder %s15, 0
      %p77 = por %p75, %p76
      %p78 = scmp.ne.s32.totalorder %s70, %s72
      %p79 = scmp.eq.s32.totalorder %s20, 1
      %p80 = por %p78, %p79
      %p81 = scmp.ne.s32.totalorder %s72, %s73
      %p82 = scmp.eq.s32.totalorder %s20, 0
      %p83 = por %p81, %p82
      %p84 = scmp.ne.s32.totalorder %s72, %s73
      %p85 = scmp.eq.s32.totalorder %s21, 1
      %p86 = por %p84, %p85
      %p88 = scmp.ne.s32.totalorder %s73, %s87
      %p89 = scmp.eq.s32.totalorder %s21, 0
      %p90 = por %p88, %p89
      %s92 = sadd.s32 %s91, 1
      %p95 = scmp.eq.s32.totalorder %s15, 1
      %p96 = scmp.ne.s32.totalorder %s91, %s93
      %p97 = scmp.eq.s32.totalorder %s15, 0
      %p98 = por %p96, %p97
      %p99 = scmp.ne.s32.totalorder %s91, %s93
      %p100 = scmp.eq.s32.totalorder %s20, 1
      %p101 = por %p99, %p100
      %p102 = scmp.ne.s32.totalorder %s93, %s94
      %p103 = scmp.eq.s32.totalorder %s20, 0
      %p104 = por %p102, %p103
      %p105 = scmp.ne.s32.totalorder %s93, %s94
      %p106 = scmp.eq.s32.totalorder %s21, 1
      %p107 = por %p105, %p106
      %p109 = scmp.ne.s32.totalorder %s94, %s108
      %p110 = scmp.eq.s32.totalorder %s21, 0
      %p111 = por %p109, %p110
      %s113 = sadd.s32 %s112, 1
      %p116 = scmp.eq.s32.totalorder %s15, 1
      %p117 = scmp.ne.s32.totalorder %s112, %s114
      %p118 = scmp.eq.s32.totalorder %s15, 0
      %p119 = por %p117, %p118
      %p120 = scmp.ne.s32.totalorder %s112, %s114
      %p121 = scmp.eq.s32.totalorder %s20, 1
      %p122 = por %p120, %p121
      %p123 = scmp.ne.s32.totalorder %s114, %s115
      %p124 = scmp.eq.s32.totalorder %s20, 0
      %p125 = por %p123, %p124
      %p126 = scmp.ne.s32.totalorder %s114, %s115
      %p127 = scmp.eq.s32.totalorder %s21, 1
      %p128 = por %p126, %p127
      %p130 = scmp.ne.s32.totalorder %s115, %s129
      %p131 = scmp.eq.s32.totalorder %s21, 0
      %p132 = por %p130, %p131
      %s134 = sadd.s32 %s133, 1
      %p137 = scmp.eq.s32.totalorder %s15, 1
      %p138 = scmp.ne.s32.totalorder %s133, %s135
      %p139 = scmp.eq.s32.totalorder %s15, 0
      %p140 = por %p138, %p139
      %p141 = scmp.ne.s32.totalorder %s133, %s135
      %p142 = scmp.eq.s32.totalorder %s20, 1
      %p143 = por %p141, %p142
      %p144 = scmp.ne.s32.totalorder %s135, %s136
      %p145 = scmp.eq.s32.totalorder %s20, 0
      %p146 = por %p144, %p145
      %p147 = scmp.ne.s32.totalorder %s135, %s136
      %p148 = scmp.eq.s32.totalorder %s21, 1
      %p149 = por %p147, %p148
      %p151 = scmp.ne.s32.totalorder %s136, %s150
      %p152 = scmp.eq.s32.totalorder %s21, 0
      %p153 = por %p151, %p152
      %s154 = ssub.s32 %s15, %s22
      %p155 = scmp.eq.s32.totalorder %s154, 0
      %s157 = sadd.s32 %s156, 1
      %s158 = scalar_select %p155, %s156, %s157
      %p161 = pneg %p155
      %p162 = scmp.eq.s32.totalorder %s15, 1
      %p163 = por %p161, %p162
      %p164 = scmp.ne.s32.totalorder %s156, %s159
      %p165 = scmp.eq.s32.totalorder %s15, 0
      %p166 = por %p164, %p165
      %p167 = scmp.ne.s32.totalorder %s156, %s159
      %p168 = scmp.eq.s32.totalorder %s20, 1
      %p169 = por %p167, %p168
      %p170 = scmp.ne.s32.totalorder %s159, %s160
      %p171 = scmp.eq.s32.totalorder %s20, 0
      %p172 = por %p170, %p171
      %p173 = scmp.ne.s32.totalorder %s159, %s160
      %p174 = scmp.eq.s32.totalorder %s21, 1
      %p175 = por %p173, %p174
      %p177 = scmp.ne.s32.totalorder %s160, %s176
      %p178 = scmp.eq.s32.totalorder %s21, 0
      %p179 = por %p177, %p178
      %p180 = scmp.le.s32.totalorder 1, %s15
      %p181 = scmp.lt.s32.totalorder %s15, 3
      %p182 = pnand %p180, %p181
      %p183 = pneg %p182
      // Predicated region
      $region9: #{tpu_custom_call.1} parent=5 // pred_check
        _
      $region10: #{tpu_custom_call.1} parent=5 // pred_check_branch
        %185 = sbr.rel (%p182) target = $region12
      $region11: #{tpu_custom_call.1} parent=5 // pred_region
        %s186 = ssub.s32 %s15, 1
        // Predicated region
        $region13: #{tpu_custom_call.1} parent=11 // pred_check
          %p187 = pneg %p62
        $region14: #{tpu_custom_call.1} parent=11 // pred_check_branch
          %189 = sbr.rel (%p187) target = $region16
        $region15: #{tpu_custom_call.1} parent=11 // pred_region
          _
        $region16: #{tpu_custom_call.1} parent=11 // pred_fallthru
          _
        // Predicated region
        $region17: #{tpu_custom_call.1} parent=11 // pred_check
          %p190 = pneg %p83
        $region18: #{tpu_custom_call.1} parent=11 // pred_check_branch
          %192 = sbr.rel (%p190) target = $region20
        $region19: #{tpu_custom_call.1} parent=11 // pred_region
          _
        $region20: #{tpu_custom_call.1} parent=11 // pred_fallthru
          _
        // Predicated region
        $region21: #{tpu_custom_call.1} parent=11 // pred_check
          %p193 = pneg %p104
        $region22: #{tpu_custom_call.1} parent=11 // pred_check_branch
          %195 = sbr.rel (%p193) target = $region24
        $region23: #{tpu_custom_call.1} parent=11 // pred_region
          _
        $region24: #{tpu_custom_call.1} parent=11 // pred_fallthru
          _
        // Predicated region
        $region25: #{tpu_custom_call.1} parent=11 // pred_check
          %p196 = pneg %p125
        $region26: #{tpu_custom_call.1} parent=11 // pred_check_branch
          %198 = sbr.rel (%p196) target = $region28
        $region27: #{tpu_custom_call.1} parent=11 // pred_region
          _
        $region28: #{tpu_custom_call.1} parent=11 // pred_fallthru
          _
        // Predicated region
        $region29: #{tpu_custom_call.1} parent=11 // pred_check
          %p199 = pneg %p146
        $region30: #{tpu_custom_call.1} parent=11 // pred_check_branch
          %201 = sbr.rel (%p199) target = $region32
        $region31: #{tpu_custom_call.1} parent=11 // pred_region
          _
        $region32: #{tpu_custom_call.1} parent=11 // pred_fallthru
          _
      $region12: #{tpu_custom_call.1} parent=5 // pred_fallthru
        _
      %p202 = scmp.lt.s32.totalorder %s15, 2
      // Predicated region
      $region33: #{tpu_custom_call.1} parent=5 // pred_check
        %p203 = pneg %p202
      $region34: #{tpu_custom_call.1} parent=5 // pred_check_branch
        %205 = sbr.rel (%p203) target = $region36
      $region35: #{tpu_custom_call.1} parent=5 // pred_region
        // Predicated region
        $region37: #{tpu_custom_call.1} parent=35 // pred_check
          %p206 = pneg %p35
        $region38: #{tpu_custom_call.1} parent=35 // pred_check_branch
          %208 = sbr.rel (%p206) target = $region40
        $region39: #{tpu_custom_call.1} parent=35 // pred_region
          %s209 = smul.u32 2, %s15
          %s210 = ssub.s32 3, %s209
          %p211 = scmp.lt.s32.totalorder %s210, 2
          %s212 = scalar_select %p211, %s210, 2
          %s213 = smul.u32 128, %s212
          %p214 = scmp.lt.s32.totalorder %s209, 2
          %s215 = scalar_select %p214, %s209, 2
          %s216 = smul.addr %s215, 8
          %s217 = scalar_lea.vmem %s0, %s216
          %s218 = smul.u32 2, %s15
          %s219 = ssub.s32 3, %s218
          %p220 = scmp.lt.s32.totalorder %s219, 2
          %s221 = scalar_select %p220, %s219, 2
          %s222 = smul.u32 128, %s221
        $region40: #{tpu_custom_call.1} parent=35 // pred_fallthru
          _
      $region36: #{tpu_custom_call.1} parent=5 // pred_fallthru
        _
      %p223 = scmp.le.s32.totalorder 1, %s15
      %p224 = scmp.lt.s32.totalorder %s15, 3
      %p225 = pnand %p223, %p224
      %p226 = pneg %p225
      // Predicated region
      $region41: #{tpu_custom_call.1} parent=5 // pred_check
        _
      $region42: #{tpu_custom_call.1} parent=5 // pred_check_branch
        %228 = sbr.rel (%p225) target = $region44
      $region43: #{tpu_custom_call.1} parent=5 // pred_region
        %s229 = ssub.s32 %s15, 1
        %s230 = smul.u32 2, %s20
        %s231 = ssub.s32 3, %s230
        %p232 = scmp.lt.s32.totalorder %s231, 2
        %s233 = scalar_select %p232, %s231, 2
        %s234 = smul.u32 128, %s233
        %p235 = scmp.lt.s32.totalorder %s230, 2
        %s236 = scalar_select %p235, %s230, 2
        %s237 = smul.addr %s236, 8
        %s238 = scalar_lea.vmem %s0, %s237
        %p239 = pneg %p41
        %p240 = pneg %p38
        %p241 = pneg %p62
        %p242 = pneg %p59
        %p243 = pneg %p83
        %p244 = pneg %p80
        %p245 = pneg %p104
        %p246 = pneg %p101
        %p247 = pneg %p125
        %p248 = pneg %p122
        %p249 = pneg %p146
        %p250 = pneg %p143
        %p251 = pneg %p172
        %p252 = pneg %p169
        %s253 = sand.u32 %s159, 1
        %s254 = scalar_lea.sflag [#allocation3], %s253
        %s255 = sand.u32 %s159, 1
        %s256 = smul.addr %s255, 16
        %s257 = scalar_lea.vmem [#allocation2], %s256
        %s258 = smul.u32 2, %s20
        %s259 = ssub.s32 3, %s258
        %p260 = scmp.lt.s32.totalorder %s259, 2
        %s261 = scalar_select %p260, %s259, 2
        %s262 = smul.u32 128, %s261
        %p263 = scmp.lt.s32.totalorder %s258, 2
        %s264 = scalar_select %p263, %s258, 2
        %s265 = smul.addr %s264, 8
        %s266 = scalar_lea.vmem %s0, %s265
        %s267 = smul.u32 2, %s20
        %s268 = ssub.s32 3, %s267
        %p269 = scmp.lt.s32.totalorder %s268, 2
        %s270 = scalar_select %p269, %s268, 2
        %s271 = smul.u32 128, %s270
        %s272 = smul.u32 2, %s20
        %s273 = ssub.s32 3, %s272
        %p274 = scmp.lt.s32.totalorder %s273, 2
        %s275 = scalar_select %p274, %s273, 2
        %s276 = smul.u32 128, %s275
        %v277 = vld [vmem:[%s266] sm:$0xff]
        %v278 = vld [vmem:[%s266 + $0x8] sm:$0xff]
        %v279 = vld [vmem:[%s1] sm:$0xff]
        %v280 = vld [vmem:[%s1 + $0x8] sm:$0xff]
        %v281 = vld [vmem:[%s1 + $0x10] sm:$0xff]
        %v282 = vld [vmem:[%s1 + $0x18] sm:$0xff]
        %vm283 = vcmask 261120
        %v285 = vsel %vm283, %v277, 0
        %v288 = vsel %vm283, %v278, 0
        %290 = vmatprep.subr.mxu0 0.0
        %291 = vmatpush1.msra.mxu0 %v279
        %292 = vmatprep.subr.mxu0 0.0
        %293 = vmatpush1.msra.mxu0 %v280
        %294 = vmatprep.subr.mxu0 0.0
        %295 = vmatpush1.msra.mxu0 %v281
        %296 = vmatprep.subr.mxu0 0.0
        %297 = vmatpush1.msra.mxu0 %v282
        %298 = vmatprep.subr.mxu0 0.0
        %299 = vmatpush1.msra.mxu0 0.0
        %300 = vmatprep.subr.mxu0 0.0
        %301 = vmatpush1.msra.mxu0 0.0
        %302 = vmatprep.subr.mxu0 0.0
        %303 = vmatpush1.msra.mxu0 0.0
        %304 = vmatprep.subr.mxu0 0.0
        %305 = vmatpush1.msra.mxu0 0.0
        %306 = vmatprep.subr.mxu0 0.0
        %307 = vmatpush1.msra.mxu0 0.0
        %308 = vmatprep.subr.mxu0 0.0
        %309 = vmatpush1.msra.mxu0 0.0
        %310 = vmatprep.subr.mxu0 0.0
        %311 = vmatpush1.msra.mxu0 0.0
        %312 = vmatprep.subr.mxu0 0.0
        %313 = vmatpush1.msra.mxu0 0.0
        %314 = vmatprep.subr.mxu0 0.0
        %315 = vmatpush1.msra.mxu0 0.0
        %316 = vmatprep.subr.mxu0 0.0
        %317 = vmatpush1.msra.mxu0 0.0
        %318 = vmatprep.subr.mxu0 0.0
        %319 = vmatpush1.msra.mxu0 0.0
        %320 = vmatprep.subr.mxu0 0.0
        %321 = vmatpush1.msra.mxu0 0.0
        %322 = vmatprep.subr.mxu0 0.0
        %323 = vmatpush1.msra.mxu0 0.0
        %324 = vmatprep.subr.mxu0 0.0
        %325 = vmatpush1.msra.mxu0 0.0
        %326 = vmatprep.subr.mxu0 0.0
        %327 = vmatpush1.msra.mxu0 0.0
        %328 = vmatprep.subr.mxu0 0.0
        %329 = vmatpush1.msra.mxu0 0.0
        %330 = vmatprep.subr.mxu0 0.0
        %331 = vmatpush1.msra.mxu0 0.0
        %332 = vmatprep.subr.mxu0 0.0
        %333 = vmatpush1.msra.mxu0 0.0
        %334 = vmatprep.subr.mxu0 0.0
        %335 = vmatpush1.msra.mxu0 0.0
        %336 = vmatprep.subr.mxu0 0.0
        %337 = vmatpush1.msra.mxu0 0.0
        %338 = vmatprep.subr.mxu0 0.0
        %339 = vmatpush1.msra.mxu0 0.0
        %340 = vmatprep.subr.mxu0 0.0
        %341 = vmatpush1.msra.mxu0 0.0
        %342 = vmatprep.subr.mxu0 0.0
        %343 = vmatpush1.msra.mxu0 0.0
        %344 = vmatprep.subr.mxu0 0.0
        %345 = vmatpush1.msra.mxu0 0.0
        %346 = vmatprep.subr.mxu0 0.0
        %347 = vmatpush1.msra.mxu0 0.0
        %348 = vmatprep.subr.mxu0 0.0
        %349 = vmatpush1.msra.mxu0 0.0
        %350 = vmatprep.subr.mxu0 0.0
        %351 = vmatpush1.msra.mxu0 0.0
        %352 = vmatprep.subr.mxu0 0.0
        %353 = vmatpush1.msra.mxu0 0.0
        %354 = vmatprep.mubr.f32.mxu0 0.0
        %355 = vmatmul.mubr.f32.gmra.mrb[0].mxu0 %v285
        %v356 = vpop.f32.mrb[0].mxu0
        %v357 = vadd.f32 0.0, %v356
        %v358 = vpop.f32.mrb[0].mxu0
        %359 = vmatprep.mubr.f32.mxu0 0.0
        %360 = vmatmul.mubr.f32.gmra.mrb[0].mxu0 %v288
        %v361 = vpop.f32.mrb[0].mxu0
        %v362 = vadd.f32 0.0, %v361
        %v363 = vpop.f32.mrb[0].mxu0
        %364 = vdwg.mxu0
        %v365 = vld [vmem:[%s2] sm:$0x1]
        %v367 = vlaneseq
        %v368 = vshrl.u32 %v367, 7
        %v369 = vsub.s32 0, %v368
        %v370 = vrot.slane %v365, %v369
        %v372 = vmul.f32 %v357, %v370
        %v373 = vmul.f32 %v362, %v370
        %v374 = vld [vmem:[%s3] sm:$0x1]
        %v376 = vlaneseq
        %v377 = vshrl.u32 %v376, 7
        %v378 = vsub.s32 0, %v377
        %v379 = vrot.slane %v374, %v378
        %v381 = vadd.f32 %v372, %v379
        %v382 = vadd.f32 %v373, %v379
        %v383 = vmax.f32 %v381, 0.0
        %v384 = vmax.f32 %v382, 0.0
        %v385 = vld [vmem:[%s4] sm:$0xff]
        %v386 = vld [vmem:[%s4 + $0x8] sm:$0xff]
        %v387 = vld [vmem:[%s5] sm:$0x1]
        %v389 = vlaneseq
        %v390 = vshrl.u32 %v389, 7
        %v391 = vsub.s32 0, %v390
        %v392 = vrot.slane %v387, %v391
        %vm394 = vcmask 130048
        %v396 = vsel %vm394, %v383, 0
        %v399 = vsel %vm394, %v384, 0
        %401 = vmatprep.subr.mxu0 0.0
        %402 = vmatpush1.msra.mxu0 %v385
        %403 = vmatprep.subr.mxu0 0.0
        %404 = vmatpush1.msra.mxu0 %v386
        %405 = vmatprep.subr.mxu0 0.0
        %406 = vmatpush1.msra.mxu0 0.0
        %407 = vmatprep.subr.mxu0 0.0
        %408 = vmatpush1.msra.mxu0 0.0
        %409 = vmatprep.subr.mxu0 0.0
        %410 = vmatpush1.msra.mxu0 0.0
        %411 = vmatprep.subr.mxu0 0.0
        %412 = vmatpush1.msra.mxu0 0.0
        %413 = vmatprep.subr.mxu0 0.0
        %414 = vmatpush1.msra.mxu0 0.0
        %415 = vmatprep.subr.mxu0 0.0
        %416 = vmatpush1.msra.mxu0 0.0
        %417 = vmatprep.subr.mxu0 0.0
        %418 = vmatpush1.msra.mxu0 0.0
        %419 = vmatprep.subr.mxu0 0.0
        %420 = vmatpush1.msra.mxu0 0.0
        %421 = vmatprep.subr.mxu0 0.0
        %422 = vmatpush1.msra.mxu0 0.0
        %423 = vmatprep.subr.mxu0 0.0
        %424 = vmatpush1.msra.mxu0 0.0
        %425 = vmatprep.subr.mxu0 0.0
        %426 = vmatpush1.msra.mxu0 0.0
        %427 = vmatprep.subr.mxu0 0.0
        %428 = vmatpush1.msra.mxu0 0.0
        %429 = vmatprep.subr.mxu0 0.0
        %430 = vmatpush1.msra.mxu0 0.0
        %431 = vmatprep.subr.mxu0 0.0
        %432 = vmatpush1.msra.mxu0 0.0
        %433 = vmatprep.subr.mxu0 0.0
        %434 = vmatpush1.msra.mxu0 0.0
        %435 = vmatprep.subr.mxu0 0.0
        %436 = vmatpush1.msra.mxu0 0.0
        %437 = vmatprep.subr.mxu0 0.0
        %438 = vmatpush1.msra.mxu0 0.0
        %439 = vmatprep.subr.mxu0 0.0
        %440 = vmatpush1.msra.mxu0 0.0
        %441 = vmatprep.subr.mxu0 0.0
        %442 = vmatpush1.msra.mxu0 0.0
        %443 = vmatprep.subr.mxu0 0.0
        %444 = vmatpush1.msra.mxu0 0.0
        %445 = vmatprep.subr.mxu0 0.0
        %446 = vmatpush1.msra.mxu0 0.0
        %447 = vmatprep.subr.mxu0 0.0
        %448 = vmatpush1.msra.mxu0 0.0
        %449 = vmatprep.subr.mxu0 0.0
        %450 = vmatpush1.msra.mxu0 0.0
        %451 = vmatprep.subr.mxu0 0.0
        %452 = vmatpush1.msra.mxu0 0.0
        %453 = vmatprep.subr.mxu0 0.0
        %454 = vmatpush1.msra.mxu0 0.0
        %455 = vmatprep.subr.mxu0 0.0
        %456 = vmatpush1.msra.mxu0 0.0
        %457 = vmatprep.subr.mxu0 0.0
        %458 = vmatpush1.msra.mxu0 0.0
        %459 = vmatprep.subr.mxu0 0.0
        %460 = vmatpush1.msra.mxu0 0.0
        %461 = vmatprep.subr.mxu0 0.0
        %462 = vmatpush1.msra.mxu0 0.0
        %463 = vmatprep.subr.mxu0 0.0
        %464 = vmatpush1.msra.mxu0 0.0
        %465 = vmatprep.mubr.f32.mxu0 0.0
        %466 = vmatmul.mubr.f32.gmra.mrb[0].mxu0 %v396
        %v467 = vpop.f32.mrb[0].mxu0
        %v468 = vadd.f32 %v392, %v467
        %v469 = vpop.f32.mrb[0].mxu0
        %470 = vmatprep.mubr.f32.mxu0 0.0
        %471 = vmatmul.mubr.f32.gmra.mrb[0].mxu0 %v399
        %v472 = vpop.f32.mrb[0].mxu0
        %v473 = vadd.f32 %v392, %v472
        %v474 = vpop.f32.mrb[0].mxu0
        %475 = vdwg.mxu0
        %476 = vst [vmem:[%s257] sm:$0xff] %v468
        %477 = vst [vmem:[%s257 + $0x8] sm:$0xff] %v473
        %s478 = sand.u32 %s159, 1
        %s479 = scalar_lea.sflag [#allocation3], %s478
        %s480 = sand.u32 %s159, 1
        %s481 = smul.addr %s480, 16
        %s482 = scalar_lea.vmem [#allocation2], %s481
        // Predicated region
        $region45: #{tpu_custom_call.1} parent=43 // pred_check
          %p483 = pneg %p169
        $region46: #{tpu_custom_call.1} parent=43 // pred_check_branch
          %485 = sbr.rel (%p483) target = $region48
        $region47: #{tpu_custom_call.1} parent=43 // pred_region
          %s486 = smul.u32 2, %s20
          %s487 = ssub.s32 3, %s486
          %p488 = scmp.lt.s32.totalorder %s487, 2
          %s489 = scalar_select %p488, %s487, 2
          %s490 = smul.u32 128, %s489
          %s492 = ssub.s32 256, %s490
          %493 = vsyncadd %s479, %s492
          %p494 = scmp.ne.s32.totalorder 0, %s490
          %s495 = smul.addr %s486, 128
          %s496 = scalar_lea.hbm %s6, %s495
          %s497 = smul.u32 8, %s489
          %s498 = sshll.u32 %s482, 4
          %s499 = int_to_ptr.vmem [resolvable:$true] %s498
          %s500 = sshll.u32 %s497, 4
          %504 = dma.vmem_to_hbm [thread:$0]  (%p494), %s499, %s500, %s496, %s479, 128, 128, 8
        $region48: #{tpu_custom_call.1} parent=43 // pred_fallthru
          _
      $region44: #{tpu_custom_call.1} parent=5 // pred_fallthru
        _
      %p505 = scmp.le.s32.totalorder 2, %s15
      // Predicated region
      $region49: #{tpu_custom_call.1} parent=5 // pred_check
        %p506 = pneg %p505
      $region50: #{tpu_custom_call.1} parent=5 // pred_check_branch
        %508 = sbr.rel (%p506) target = $region52
      $region51: #{tpu_custom_call.1} parent=5 // pred_region
        %s509 = ssub.s32 %s15, 2
        // Predicated region
        $region53: #{tpu_custom_call.1} parent=51 // pred_check
          %p510 = pneg %p175
        $region54: #{tpu_custom_call.1} parent=51 // pred_check_branch
          %512 = sbr.rel (%p510) target = $region56
        $region55: #{tpu_custom_call.1} parent=51 // pred_region
          %s513 = sand.u32 %s160, 1
          %s514 = scalar_lea.sflag [#allocation3], %s513
          %s515 = sand.u32 %s160, 1
          %s516 = smul.addr %s515, 16
          %s517 = scalar_lea.vmem [#allocation2], %s516
          %518 = dma.done %s514, 256
        $region56: #{tpu_custom_call.1} parent=51 // pred_fallthru
          _
      $region52: #{tpu_custom_call.1} parent=5 // pred_fallthru
        _
    $region6: #{tpu_custom_call.1} parent=1 // loop_footer
      %s19 = sadd.s32 1, %s15
    $region7: #{tpu_custom_call.1} parent=1 // loop_footer_branch
      %14 = sbr.rel target = $region3
    $region8: #{tpu_custom_call.1} parent=1 // loop_exit
      _
    %519 = vsyncpa [#allocation3], 1
    %s520 = scalar_lea.sflag [#allocation3], 1
    %521 = vsyncpa %s520, 1

</llo_original>
